<compile_context>
chip_gen: v7x
topology: tpu7x:2x2x1
jax: 0.10.0
libtpu: 0.0.40
codegen_flags: <defaults>
</compile_context>

<pallas_src>
import functools

import jax
import jax.numpy as jnp
from jax.experimental import pallas as pl
from jax.experimental.pallas import tpu as pltpu

SEQ = 48       # fixed by Linear(bert_dimension * 48, ...)
HIDDEN = 200   # fixed by Linear(bert_dimension, 200)
LANE = 128
SUBLANE = 8

_VMEM_SOFT_BUDGET = 44 << 20   # stay well below v7x's 64 MiB physical VMEM


def _round_up(x, m):
    return (x + m - 1) // m * m


def _cdiv(a, b):
    return -(-a // b)


# --------------------------------------------------------------------------- #
# Kernel
# --------------------------------------------------------------------------- #
def _mlp_kernel(x_ref, w1_ref, b1_ref, w2_ref, b2_ref, w3_ref, b3_ref,
                o_ref, acc_ref):
    """Fused ((x @ W1 + b1)^3 @ W2 + b2).relu @ W3 + b3, K-tiled first matmul."""
    k = pl.program_id(1)

    @pl.when(k == 0)
    def _():
        acc_ref[...] = jnp.zeros_like(acc_ref)

    # Dominant matmul: stream W1 over the K grid axis, accumulate in f32.
    acc_ref[...] += jnp.dot(x_ref[...], w1_ref[...],
                            preferred_element_type=jnp.float32)

    # Tiny epilogue, once per M tile (last K step only).
    @pl.when(k == pl.num_programs(1) - 1)
    def _():
        h = acc_ref[...] + b1_ref[...]                  # [tm, Dp] f32
        h = h * h * h                                   # cube, f32 (VPU)
        h2 = jnp.dot(h.astype(w2_ref.dtype), w2_ref[...],
                     preferred_element_type=jnp.float32) + b2_ref[...]
        h2 = jnp.maximum(h2, 0.0)                       # relu, f32
        o_ref[...] = (jnp.dot(h2.astype(w3_ref.dtype), w3_ref[...],
                              preferred_element_type=jnp.float32)
                      + b3_ref[...])


# --------------------------------------------------------------------------- #
# Parameter packing: pad to lane-dense shapes, cast weights to bf16.
# Zero padding is exact here: padded h columns are (0+0)^3 = 0 and the padded
# W2/W3 rows are zero, so real output columns are unchanged.
# --------------------------------------------------------------------------- #
def pack_params(params, *, tk=2048):
    emb = params["embedding"]                  # [vocab, D]
    w1t, b1 = params["w1t"], params["b1"]      # [48*D, D], [1, D]
    w2t, b2 = params["w2t"], params["b2"]      # [D, 200],  [1, 200]
    w3t, b3 = params["w3t"], params["b3"]      # [200, T],  [1, T]

    D = emb.shape[1]
    K = SEQ * D
    T = w3t.shape[1]

    Dp = _round_up(D, LANE)
    Hp = _round_up(HIDDEN, LANE)
    Tp = _round_up(T, LANE)

    # Large K-tile (fewer grid steps, bigger DMA segments), multiple of 256
    # for the 256x256 MXU, clamped so a 3-deep (tk, Dp) bf16 W1 stream stays
    # comfortably inside VMEM even on v7x.
    tk_cap = max(256, ((16 << 20) // (3 * Dp * 2)) // 256 * 256)
    tk_desired = max(256, min(_round_up(min(tk, K), 256), tk_cap))
    n_k = _cdiv(K, tk_desired)
    tk = _round_up(_cdiv(K, n_k), 256)
    Kp = n_k * tk

    def pad2(a, rows, cols):
        return jnp.pad(a, ((0, rows - a.shape[0]), (0, cols - a.shape[1])))

    packed = {
        "embedding": emb.astype(jnp.bfloat16),
        "w1": pad2(w1t, Kp, Dp).astype(jnp.bfloat16),
        "b1": pad2(b1, 1, Dp).astype(jnp.float32),
        "w2": pad2(w2t, Dp, Hp).astype(jnp.bfloat16),
        "b2": pad2(b2, 1, Hp).astype(jnp.float32),
        "w3": pad2(w3t, Hp, Tp).astype(jnp.bfloat16),
        "b3": pad2(b3, 1, Tp).astype(jnp.float32),
    }
    meta = {"tk": int(tk), "target": int(T)}
    return packed, meta


# --------------------------------------------------------------------------- #
# Chip-generation heuristics (tile cap + megacore preference)
# --------------------------------------------------------------------------- #
_CHIP_CFG = None


def _chip_config():
    """Returns (tm_cap, prefer_two_m_tiles)."""
    global _CHIP_CFG
    if _CHIP_CFG is None:
        try:
            kind = jax.devices()[0].device_kind.lower()
        except Exception:
            kind = ""
        is_v5e = ("v5 lite" in kind) or ("v5e" in kind) or ("v5litepod" in kind)
        multi_tc = "7" in kind          # v7x: 2 TensorCores share the grid
        _CHIP_CFG = (256 if is_v5e else 512, multi_tc)
    return _CHIP_CFG


# --------------------------------------------------------------------------- #
# Forward
# --------------------------------------------------------------------------- #
@functools.partial(
    jax.jit, static_argnames=("tk", "target", "tm_cap", "two_tiles", "buffered"))
def _forward(source_ids, packed, *, tk, target, tm_cap, two_tiles, buffered):
    emb = packed["embedding"]
    w1, b1 = packed["w1"], packed["b1"]
    w2, b2 = packed["w2"], packed["b2"]
    w3, b3 = packed["w3"], packed["b3"]

    B, seq = source_ids.shape
    D = emb.shape[1]
    K = seq * D
    Kp, Dp = w1.shape
    Hp = w2.shape[1]
    Tp = w3.shape[1]

    # Embedding gather + flatten (glue; jnp.take clamps OOB ids vs PyTorch).
    # TODO(synk): fuse this gather into the kernel via scalar-prefetched ids +
    # manual per-row DMA from an HBM table to avoid the [B, 48*D] round trip.
    x = jnp.take(emb, source_ids, axis=0).reshape(B, K)        # bf16 [B, K]

    # ---- M-tile selection: generation-aware cap, >=2 tiles for megacore,
    #      then VMEM-budgeted shrink. ----
    Bp_min = _round_up(B, SUBLANE)
    n_m = _cdiv(Bp_min, tm_cap)
    if two_tiles and n_m == 1 and Bp_min >= 2 * LANE:
        n_m = 2                       # shard batch across both v7x TensorCores
    tm = _round_up(_cdiv(Bp_min, n_m), SUBLANE)

    n_stream_buf = 3 if buffered else 2
    n_res_buf = 1 if buffered else 2

    def vmem_bytes(tm_):
        return (n_stream_buf * (tm_ * tk + tk * Dp) * 2   # streamed x, W1 (bf16)
                + n_res_buf * (Dp * Hp + Hp * Tp) * 2     # resident W2, W3 (bf16)
                + n_res_buf * (Dp + Hp + Tp) * 4          # resident biases (f32)
                + tm_ * Dp * 4                            # f32 accumulator scratch
                + 2 * tm_ * Tp * 4)                       # output blocks (f32)

    while vmem_bytes(tm) > _VMEM_SOFT_BUDGET and tm > SUBLANE:
        tm = max(SUBLANE, _round_up(tm // 2, SUBLANE))
    n_m = _cdiv(Bp_min, tm)
    Bp = n_m * tm

    x = jnp.pad(x, ((0, Bp - B), (0, Kp - K)))
    grid = (Bp // tm, Kp // tk)

    def spec(shape, index_map, nbuf):
        if buffered:
            return pl.BlockSpec(shape, index_map, pipeline_mode=pl.Buffered(nbuf))
        return pl.BlockSpec(shape, index_map)

    in_specs = [
        spec((tm, tk), lambda i, k: (i, k), 3),   # x   (streamed over i, k)
        spec((tk, Dp), lambda i, k: (k, 0), 3),   # W1  (streamed over k)
        spec((1, Dp), lambda i, k: (0, 0), 1),    # b1  (grid-invariant)
        spec((Dp, Hp), lambda i, k: (0, 0), 1),   # W2  (grid-invariant)
        spec((1, Hp), lambda i, k: (0, 0), 1),    # b2  (grid-invariant)
        spec((Hp, Tp), lambda i, k: (0, 0), 1),   # W3  (grid-invariant)
        spec((1, Tp), lambda i, k: (0, 0), 1),    # b3  (grid-invariant)
    ]

    vmem_limit = int(max(vmem_bytes(tm) + (8 << 20), 16 << 20))

    flops = 2 * Bp * (Kp * Dp + Dp * Hp + Hp * Tp)
    bytes_accessed = (Bp * Kp * 2                  # x read once
                      + n_m * Kp * Dp * 2          # W1 re-streamed per M tile
                      + (Dp * Hp + Hp * Tp) * 2    # resident epilogue weights
                      + (Dp + Hp + Tp) * 4         # biases
                      + Bp * Tp * 4)               # output write

    out = pl.pallas_call(
        _mlp_kernel,
        out_shape=jax.ShapeDtypeStruct((Bp, Tp), jnp.float32),
        grid_spec=pltpu.PrefetchScalarGridSpec(
            num_scalar_prefetch=0,
            grid=grid,
            in_specs=in_specs,
            out_specs=pl.BlockSpec((tm, Tp), lambda i, k: (i, 0)),
            scratch_shapes=[pltpu.VMEM((tm, Dp), jnp.float32)],
        ),
        compiler_params=pltpu.CompilerParams(
            dimension_semantics=("parallel", "arbitrary"),
            vmem_limit_bytes=vmem_limit,
        ),
        cost_estimate=pl.CostEstimate(
            flops=flops, transcendentals=0, bytes_accessed=bytes_accessed),
    )(x, w1, b1, w2, b2, w3, b3)

    return out[:B, :target]


# Runtime feature-guard for BlockSpec.pipeline_mode / pl.Buffered: if the
# installed Pallas rejects it, fall back to default double-buffered specs.
_BUFFERED_STATE = {"ok": hasattr(pl, "Buffered"), "verified": False}


def train_model_forward(source_ids, packed, meta):
    """source_ids: int32 [B, 48].  Returns float32 [B, target]."""
    tm_cap, two_tiles = _chip_config()
    kw = dict(tk=meta["tk"], target=meta["target"],
              tm_cap=tm_cap, two_tiles=two_tiles)
    if _BUFFERED_STATE["ok"]:
        if _BUFFERED_STATE["verified"]:
            return _forward(source_ids, packed, buffered=True, **kw)
        try:
            out = _forward(source_ids, packed, buffered=True, **kw)
            jax.block_until_ready(out)
            _BUFFERED_STATE["verified"] = True
            return out
        except Exception:
            _BUFFERED_STATE["ok"] = False
    return _forward(source_ids, packed, buffered=False, **kw)


# --------------------------------------------------------------------------- #
# Synthetic parameter init (no file loading) + plain-JAX reference
# --------------------------------------------------------------------------- #
def init_params(key, vocab_num, bert_dimension, target, seq_len=SEQ):
    D = bert_dimension
    k = jax.random.split(key, 7)

    def lin(kw_, kb, fan_in, fan_out):
        bound = 1.0 / jnp.sqrt(fan_in)
        w = jax.random.uniform(kw_, (fan_out, fan_in), jnp.float32, -bound, bound)
        b = jax.random.uniform(kb, (1, fan_out), jnp.float32, -bound, bound)
        return w.T, b  # store W^T so forward computes x @ W^T + b

    embedding = jax.random.normal(k[0], (vocab_num, D), jnp.float32)
    w1t, b1 = lin(k[1], k[2], D * seq_len, D)
    w2t, b2 = lin(k[3], k[4], D, 200)
    w3t, b3 = lin(k[5], k[6], 200, target)
    return {"embedding": embedding,
            "w1t": w1t, "b1": b1,
            "w2t": w2t, "b2": b2,
            "w3t": w3t, "b3": b3}


def reference_forward(source_ids, params):
    """Plain-JAX reference with the same bf16-weight / f32-accum scheme."""
    emb = params["embedding"].astype(jnp.bfloat16)
    B = source_ids.shape[0]
    x = jnp.take(emb, source_ids, axis=0).reshape(B, -1)
    h = jnp.dot(x, params["w1t"].astype(jnp.bfloat16),
                preferred_element_type=jnp.float32) + params["b1"]
    h = h * h * h
    h = jnp.dot(h.astype(jnp.bfloat16), params["w2t"].astype(jnp.bfloat16),
                preferred_element_type=jnp.float32) + params["b2"]
    h = jnp.maximum(h, 0.0)
    return jnp.dot(h.astype(jnp.bfloat16), params["w3t"].astype(jnp.bfloat16),
                   preferred_element_type=jnp.float32) + params["b3"]


if __name__ == "__main__":
    # Small deterministic shapes consistent with the module
    # (seq length is fixed at 48 by Linear(bert_dimension * 48, ...)).
    B = 2
    BERT_DIM = 32
    VOCAB = 64
    TARGET = 8

    key = jax.random.PRNGKey(0)
    k_params, k_ids = jax.random.split(key)

    params = init_params(k_params, VOCAB, BERT_DIM, TARGET)
    packed, meta = pack_params(params)
    source_ids = jax.random.randint(k_ids, (B, SEQ), 0, VOCAB, dtype=jnp.int32)

    out = train_model_forward(source_ids, packed, meta)
    jax.block_until_ready(out)

    assert out.shape == (B, TARGET), out.shape
    assert bool(jnp.all(jnp.isfinite(out)))

    ref = reference_forward(source_ids, params)
    max_err = float(jnp.max(jnp.abs(out - ref)))
    assert bool(jnp.allclose(out, ref, rtol=1e-2, atol=1e-2)), max_err

    print("KERNEL_OK")
</pallas_src>

<mosaic_0001>
module attributes {stable_mosaic.version = 11 : i64} {
  func.func @_mlp_kernel(%arg0: i32, %arg1: i32, %arg2: memref<8x1536xbf16, #tpu.memory_space<vmem>>, %arg3: memref<1536x128xbf16, #tpu.memory_space<vmem>>, %arg4: memref<1x128xf32, #tpu.memory_space<vmem>>, %arg5: memref<128x256xbf16, #tpu.memory_space<vmem>>, %arg6: memref<1x256xf32, #tpu.memory_space<vmem>>, %arg7: memref<256x128xbf16, #tpu.memory_space<vmem>>, %arg8: memref<1x128xf32, #tpu.memory_space<vmem>>, %arg9: memref<8x128xf32, #tpu.memory_space<vmem>>, %arg10: memref<8x128xf32, #tpu.memory_space<vmem>>) attributes {dimension_semantics = [#tpu.dimension_semantics<parallel>, #tpu.dimension_semantics<arbitrary>], iteration_bounds = array<i64: 1, 1>, scalar_prefetch = 0 : i64, scratch_operands = 1 : i64, tpu.core_type = #tpu.core_type<tc>, window_params = [{transform_indices = @transform_0, window_bounds = array<i64: 8, 1536>}, {transform_indices = @transform_1, window_bounds = array<i64: 1536, 128>}, {pipeline_mode = #tpu.pipeline_mode<synchronous>, transform_indices = @transform_2, window_bounds = array<i64: 1, 128>}, {pipeline_mode = #tpu.pipeline_mode<synchronous>, transform_indices = @transform_3, window_bounds = array<i64: 128, 256>}, {pipeline_mode = #tpu.pipeline_mode<synchronous>, transform_indices = @transform_4, window_bounds = array<i64: 1, 256>}, {pipeline_mode = #tpu.pipeline_mode<synchronous>, transform_indices = @transform_5, window_bounds = array<i64: 256, 128>}, {pipeline_mode = #tpu.pipeline_mode<synchronous>, transform_indices = @transform_6, window_bounds = array<i64: 1, 128>}, {transform_indices = @transform_7, window_bounds = array<i64: 8, 128>}]} {
    %c0_i32 = arith.constant 0 : i32
    %0 = arith.cmpi eq, %arg1, %c0_i32 : i32
    %1 = arith.extui %0 : i1 to i32
    %c0_i32_0 = arith.constant 0 : i32
    %2 = arith.cmpi ne, %1, %c0_i32_0 : i32
    scf.if %2 {
      %cst_10 = arith.constant 0.000000e+00 : f32
      %12 = vector.broadcast %cst_10 : f32 to vector<8x128xf32>
      %c0_11 = arith.constant 0 : index
      %c0_12 = arith.constant 0 : index
      %13 = vector.load %arg10[%c0_11, %c0_12] : memref<8x128xf32, #tpu.memory_space<vmem>>, vector<8x128xf32>
      tpu.vector_store %arg10[%c0_11, %c0_12], %12 {strides = array<i32>} : memref<8x128xf32, #tpu.memory_space<vmem>>, vector<8x128xf32>,
    } else {
    }
    %c0 = arith.constant 0 : index
    %c0_1 = arith.constant 0 : index
    %3 = vector.load %arg10[%c0, %c0_1] : memref<8x128xf32, #tpu.memory_space<vmem>>, vector<8x128xf32>
    %c0_2 = arith.constant 0 : index
    %c0_3 = arith.constant 0 : index
    %4 = vector.load %arg2[%c0_2, %c0_3] : memref<8x1536xbf16, #tpu.memory_space<vmem>>, vector<8x1536xbf16>
    %c0_4 = arith.constant 0 : index
    %c0_5 = arith.constant 0 : index
    %5 = vector.load %arg3[%c0_4, %c0_5] : memref<1536x128xbf16, #tpu.memory_space<vmem>>, vector<1536x128xbf16>
    %cst = arith.constant dense<0.000000e+00> : vector<8x128xf32>
    %6 = tpu.matmul %4, %5, %cst {dimension_numbers = #tpu.dot_dimension_numbers<[1], [0], [0], [1], [0, 0, 1, 1], [], []>} : vector<8x1536xbf16>, vector<1536x128xbf16>, vector<8x128xf32> -> vector<8x128xf32>
    %7 = arith.addf %3, %6 : vector<8x128xf32>
    %c0_6 = arith.constant 0 : index
    %c0_7 = arith.constant 0 : index
    %8 = vector.load %arg10[%c0_6, %c0_7] : memref<8x128xf32, #tpu.memory_space<vmem>>, vector<8x128xf32>
    tpu.vector_store %arg10[%c0_6, %c0_7], %7 {strides = array<i32>} : memref<8x128xf32, #tpu.memory_space<vmem>>, vector<8x128xf32>,
    %c0_i32_8 = arith.constant 0 : i32
    %9 = arith.cmpi eq, %arg1, %c0_i32_8 : i32
    %10 = arith.extui %9 : i1 to i32
    %c0_i32_9 = arith.constant 0 : i32
    %11 = arith.cmpi ne, %10, %c0_i32_9 : i32
    scf.if %11 {
      %c0_10 = arith.constant 0 : index
      %c0_11 = arith.constant 0 : index
      %12 = vector.load %arg10[%c0_10, %c0_11] : memref<8x128xf32, #tpu.memory_space<vmem>>, vector<8x128xf32>
      %c0_12 = arith.constant 0 : index
      %c0_13 = arith.constant 0 : index
      %13 = vector.load %arg4[%c0_12, %c0_13] : memref<1x128xf32, #tpu.memory_space<vmem>>, vector<1x128xf32>
      %14 = vector.broadcast %13 : vector<1x128xf32> to vector<8x128xf32>
      %15 = arith.addf %12, %14 : vector<8x128xf32>
      %16 = arith.mulf %15, %15 : vector<8x128xf32>
      %17 = arith.mulf %16, %15 : vector<8x128xf32>
      %18 = arith.truncf %17 : vector<8x128xf32> to vector<8x128xbf16>
      %c0_14 = arith.constant 0 : index
      %c0_15 = arith.constant 0 : index
      %19 = vector.load %arg5[%c0_14, %c0_15] : memref<128x256xbf16, #tpu.memory_space<vmem>>, vector<128x256xbf16>
      %cst_16 = arith.constant dense<0.000000e+00> : vector<8x256xf32>
      %20 = tpu.matmul %18, %19, %cst_16 {dimension_numbers = #tpu.dot_dimension_numbers<[1], [0], [0], [1], [0, 0, 1, 1], [], []>} : vector<8x128xbf16>, vector<128x256xbf16>, vector<8x256xf32> -> vector<8x256xf32>
      %c0_17 = arith.constant 0 : index
      %c0_18 = arith.constant 0 : index
      %21 = vector.load %arg6[%c0_17, %c0_18] : memref<1x256xf32, #tpu.memory_space<vmem>>, vector<1x256xf32>
      %22 = vector.broadcast %21 : vector<1x256xf32> to vector<8x256xf32>
      %23 = arith.addf %20, %22 : vector<8x256xf32>
      %cst_19 = arith.constant 0.000000e+00 : f32
      %24 = vector.broadcast %cst_19 : f32 to vector<8x256xf32>
      %25 = arith.maximumf %23, %24 : vector<8x256xf32>
      %26 = arith.truncf %25 : vector<8x256xf32> to vector<8x256xbf16>
      %c0_20 = arith.constant 0 : index
      %c0_21 = arith.constant 0 : index
      %27 = vector.load %arg7[%c0_20, %c0_21] : memref<256x128xbf16, #tpu.memory_space<vmem>>, vector<256x128xbf16>
      %cst_22 = arith.constant dense<0.000000e+00> : vector<8x128xf32>
      %28 = tpu.matmul %26, %27, %cst_22 {dimension_numbers = #tpu.dot_dimension_numbers<[1], [0], [0], [1], [0, 0, 1, 1], [], []>} : vector<8x256xbf16>, vector<256x128xbf16>, vector<8x128xf32> -> vector<8x128xf32>
      %c0_23 = arith.constant 0 : index
      %c0_24 = arith.constant 0 : index
      %29 = vector.load %arg8[%c0_23, %c0_24] : memref<1x128xf32, #tpu.memory_space<vmem>>, vector<1x128xf32>
      %30 = vector.broadcast %29 : vector<1x128xf32> to vector<8x128xf32>
      %31 = arith.addf %28, %30 : vector<8x128xf32>
      %c0_25 = arith.constant 0 : index
      %c0_26 = arith.constant 0 : index
      %32 = vector.load %arg9[%c0_25, %c0_26] : memref<8x128xf32, #tpu.memory_space<vmem>>, vector<8x128xf32>
      tpu.vector_store %arg9[%c0_25, %c0_26], %31 {strides = array<i32>} : memref<8x128xf32, #tpu.memory_space<vmem>>, vector<8x128xf32>,
    } else {
    }
    return
  }
  func.func @transform_0(%arg0: i32, %arg1: i32) -> (i32, i32) {
    %c0_i32 = arith.constant 0 : i32
    return %arg0, %arg1 : i32, i32
  }
  func.func @transform_1(%arg0: i32, %arg1: i32) -> (i32, i32) {
    %c0_i32 = arith.constant 0 : i32
    %c0_i32_0 = arith.constant 0 : i32
    return %arg1, %c0_i32 : i32, i32
  }
  func.func @transform_2(%arg0: i32, %arg1: i32) -> (i32, i32) {
    %c0_i32 = arith.constant 0 : i32
    %c0_i32_0 = arith.constant 0 : i32
    %c0_i32_1 = arith.constant 0 : i32
    return %c0_i32, %c0_i32_0 : i32, i32
  }
  func.func @transform_3(%arg0: i32, %arg1: i32) -> (i32, i32) {
    %c0_i32 = arith.constant 0 : i32
    %c0_i32_0 = arith.constant 0 : i32
    %c0_i32_1 = arith.constant 0 : i32
    return %c0_i32, %c0_i32_0 : i32, i32
  }
  func.func @transform_4(%arg0: i32, %arg1: i32) -> (i32, i32) {
    %c0_i32 = arith.constant 0 : i32
    %c0_i32_0 = arith.constant 0 : i32
    %c0_i32_1 = arith.constant 0 : i32
    return %c0_i32, %c0_i32_0 : i32, i32
  }
  func.func @transform_5(%arg0: i32, %arg1: i32) -> (i32, i32) {
    %c0_i32 = arith.constant 0 : i32
    %c0_i32_0 = arith.constant 0 : i32
    %c0_i32_1 = arith.constant 0 : i32
    return %c0_i32, %c0_i32_0 : i32, i32
  }
  func.func @transform_6(%arg0: i32, %arg1: i32) -> (i32, i32) {
    %c0_i32 = arith.constant 0 : i32
    %c0_i32_0 = arith.constant 0 : i32
    %c0_i32_1 = arith.constant 0 : i32
    return %c0_i32, %c0_i32_0 : i32, i32
  }
  func.func @transform_7(%arg0: i32, %arg1: i32) -> (i32, i32) {
    %c0_i32 = arith.constant 0 : i32
    %c0_i32_0 = arith.constant 0 : i32
    return %arg0, %c0_i32 : i32, i32
  }
}

</mosaic_0001>

<llo_original>
// kernel: _forward.1
$region0: #{_forward.1}
  #allocation0 [shape = 'u32[]', space=smem, size = 0x4, offset = 0x4, fixed_abs, tag = 'smem constant byte address 0x4 - core index']
  #allocation1 [shape = 'u32[144,128]{1,0:T(1,128)}', space=vmem, size = 0x12000, scoped, tag = 'internal scratch']
  #allocation2 [shape = 'f32[8,128]{1,0:T(8,128)}', space=vmem, size = 0x1000, scoped, tag = 'scratch operand']
  %s0 = inlined_call_operand.vmem [shape: bf16[8,1536], index: 0, kind: input, shape index: {}]
  %s1 = inlined_call_operand.hbm [shape: bf16[1536,128], index: 1, kind: input, shape index: {}]
  %s2 = inlined_call_operand.vmem [shape: f32[1,128], index: 2, kind: input, shape index: {}]
  %s3 = inlined_call_operand.vmem [shape: bf16[128,256], index: 3, kind: input, shape index: {}]
  %s4 = inlined_call_operand.vmem [shape: f32[1,256], index: 4, kind: input, shape index: {}]
  %s5 = inlined_call_operand.vmem [shape: bf16[256,128], index: 5, kind: input, shape index: {}]
  %s6 = inlined_call_operand.vmem [shape: f32[1,128], index: 6, kind: input, shape index: {}]
  %s7 = inlined_call_operand.vmem [shape: f32[8,128], index: 7, kind: output, shape index: {}]
  %s8 = sld [smem:[#allocation0]]
  $region50: #{_forward.1} parent=0
    _
  %s10 = ssub.s32 1, %s8
  %s11 = scalar_select 0, %s10, %s8
  $region1: #{_forward.1} parent=0
    #allocation3 [shape = 'u8[393216]{0}', space=vmem, size = 0x60000, scoped, tag = 'input window, operand 1, single buffered']
    #allocation4 [shape = 's32[1]{0}', space=sflag, size = 0x4, scoped, tag = 'scoped memory for _forward.1']
    %12 = vsyncpa [#allocation4], 0
    // Predicated region
    $region2: #{_forward.1} parent=1 // pred_check
      _
    $region3: #{_forward.1} parent=1 // pred_check_branch
      %14 = sbr.rel (0) target = $region5
    $region4: #{_forward.1} parent=1 // pred_region
      _
    $region5: #{_forward.1} parent=1 // pred_fallthru
      _
    // Predicated region
    $region6: #{_forward.1} parent=1 // pred_check
      _
    $region7: #{_forward.1} parent=1 // pred_check_branch
      %16 = sbr.rel (0) target = $region9
    $region8: #{_forward.1} parent=1 // pred_region
      %s18 = ssub.s32 12288, 12288
      %19 = vsyncadd [#allocation4], %s18
      %s20 = sshll.u32 [#allocation3], 4
      %s21 = int_to_ptr.vmem [resolvable:$true] %s20
      %26 = dma.hbm_to_vmem [thread:$0]  %s1, 12288, %s21, [#allocation4], 64, 64, 4
    $region9: #{_forward.1} parent=1 // pred_fallthru
      _
    // Predicated region
    $region10: #{_forward.1} parent=1 // pred_check
      _
    $region11: #{_forward.1} parent=1 // pred_check_branch
      %28 = sbr.rel (0) target = $region13
    $region12: #{_forward.1} parent=1 // pred_region
      _
    $region13: #{_forward.1} parent=1 // pred_fallthru
      _
    // Predicated region
    $region14: #{_forward.1} parent=1 // pred_check
      _
    $region15: #{_forward.1} parent=1 // pred_check_branch
      %30 = sbr.rel (0) target = $region17
    $region16: #{_forward.1} parent=1 // pred_region
      _
    $region17: #{_forward.1} parent=1 // pred_fallthru
      _
    // Predicated region
    $region18: #{_forward.1} parent=1 // pred_check
      _
    $region19: #{_forward.1} parent=1 // pred_check_branch
      %32 = sbr.rel (0) target = $region21
    $region20: #{_forward.1} parent=1 // pred_region
      _
    $region21: #{_forward.1} parent=1 // pred_fallthru
      _
    // Predicated region
    $region22: #{_forward.1} parent=1 // pred_check
      _
    $region23: #{_forward.1} parent=1 // pred_check_branch
      %34 = sbr.rel (0) target = $region25
    $region24: #{_forward.1} parent=1 // pred_region
      _
    $region25: #{_forward.1} parent=1 // pred_fallthru
      _
    // Predicated region
    $region26: #{_forward.1} parent=1 // pred_check
      _
    $region27: #{_forward.1} parent=1 // pred_check_branch
      %36 = sbr.rel (0) target = $region29
    $region28: #{_forward.1} parent=1 // pred_region
      _
    $region29: #{_forward.1} parent=1 // pred_fallthru
      _
    // Predicated region
    $region30: #{_forward.1} parent=1 // pred_check
      _
    $region31: #{_forward.1} parent=1 // pred_check_branch
      %38 = sbr.rel (0) target = $region33
    $region32: #{_forward.1} parent=1 // pred_region
      %39 = dma.done [#allocation4], 12288
    $region33: #{_forward.1} parent=1 // pred_fallthru
      _
    %p41 = scmp.eq.s32.totalorder 0, 0
    // Predicated region
    $region34: #{_forward.1} parent=1 // pred_check
      %p42 = pneg %p41
    $region35: #{_forward.1} parent=1 // pred_check_branch
      %44 = sbr.rel (%p42) target = $region37
    $region36: #{_forward.1} parent=1 // pred_region
      %45 = vst [vmem:[#allocation2] sm:$0xff] 0.0
    $region37: #{_forward.1} parent=1 // pred_fallthru
      _
    %v46 = vld [vmem:[#allocation2] sm:$0xff]
    %v47 = vld [vmem:[%s0] sm:$0xff]
    %v48 = vld [vmem:[%s0 + $0x8] sm:$0xff]
    %v49 = vld [vmem:[%s0 + $0x10] sm:$0xff]
    %v50 = vld [vmem:[%s0 + $0x18] sm:$0xff]
    %v51 = vld [vmem:[%s0 + $0x20] sm:$0xff]
    %v52 = vld [vmem:[%s0 + $0x28] sm:$0xff]
    %v53 = vld [vmem:[#allocation3] sm:$0xf]
    %v54 = vld [vmem:[#allocation3 + $0x4] sm:$0xf]
    %v55 = vld [vmem:[#allocation3 + $0x8] sm:$0xf]
    %v56 = vld [vmem:[#allocation3 + $0xc] sm:$0xf]
    %v57 = vld [vmem:[#allocation3 + $0x10] sm:$0xf]
    %v58 = vld [vmem:[#allocation3 + $0x14] sm:$0xf]
    %v59 = vld [vmem:[#allocation3 + $0x18] sm:$0xf]
    %v60 = vld [vmem:[#allocation3 + $0x1c] sm:$0xf]
    %v61 = vld [vmem:[#allocation3 + $0x20] sm:$0xf]
    %v62 = vld [vmem:[#allocation3 + $0x24] sm:$0xf]
    %v63 = vld [vmem:[#allocation3 + $0x28] sm:$0xf]
    %v64 = vld [vmem:[#allocation3 + $0x2c] sm:$0xf]
    %v65 = vld [vmem:[#allocation3 + $0x30] sm:$0xf]
    %v66 = vld [vmem:[#allocation3 + $0x34] sm:$0xf]
    %v67 = vld [vmem:[#allocation3 + $0x38] sm:$0xf]
    %v68 = vld [vmem:[#allocation3 + $0x3c] sm:$0xf]
    %v69 = vld [vmem:[#allocation3 + $0x40] sm:$0xf]
    %v70 = vld [vmem:[#allocation3 + $0x44] sm:$0xf]
    %v71 = vld [vmem:[#allocation3 + $0x48] sm:$0xf]
    %v72 = vld [vmem:[#allocation3 + $0x4c] sm:$0xf]
    %v73 = vld [vmem:[#allocation3 + $0x50] sm:$0xf]
    %v74 = vld [vmem:[#allocation3 + $0x54] sm:$0xf]
    %v75 = vld [vmem:[#allocation3 + $0x58] sm:$0xf]
    %v76 = vld [vmem:[#allocation3 + $0x5c] sm:$0xf]
    %v77 = vld [vmem:[#allocation3 + $0x60] sm:$0xf]
    %v78 = vld [vmem:[#allocation3 + $0x64] sm:$0xf]
    %v79 = vld [vmem:[#allocation3 + $0x68] sm:$0xf]
    %v80 = vld [vmem:[#allocation3 + $0x6c] sm:$0xf]
    %v81 = vld [vmem:[#allocation3 + $0x70] sm:$0xf]
    %v82 = vld [vmem:[#allocation3 + $0x74] sm:$0xf]
    %v83 = vld [vmem:[#allocation3 + $0x78] sm:$0xf]
    %v84 = vld [vmem:[#allocation3 + $0x7c] sm:$0xf]
    %v85 = vld [vmem:[#allocation3 + $0x80] sm:$0xf]
    %v86 = vld [vmem:[#allocation3 + $0x84] sm:$0xf]
    %v87 = vld [vmem:[#allocation3 + $0x88] sm:$0xf]
    %v88 = vld [vmem:[#allocation3 + $0x8c] sm:$0xf]
    %v89 = vld [vmem:[#allocation3 + $0x90] sm:$0xf]
    %v90 = vld [vmem:[#allocation3 + $0x94] sm:$0xf]
    %v91 = vld [vmem:[#allocation3 + $0x98] sm:$0xf]
    %v92 = vld [vmem:[#allocation3 + $0x9c] sm:$0xf]
    %v93 = vld [vmem:[#allocation3 + $0xa0] sm:$0xf]
    %v94 = vld [vmem:[#allocation3 + $0xa4] sm:$0xf]
    %v95 = vld [vmem:[#allocation3 + $0xa8] sm:$0xf]
    %v96 = vld [vmem:[#allocation3 + $0xac] sm:$0xf]
    %v97 = vld [vmem:[#allocation3 + $0xb0] sm:$0xf]
    %v98 = vld [vmem:[#allocation3 + $0xb4] sm:$0xf]
    %v99 = vld [vmem:[#allocation3 + $0xb8] sm:$0xf]
    %v100 = vld [vmem:[#allocation3 + $0xbc] sm:$0xf]
    %v101 = vld [vmem:[#allocation3 + $0xc0] sm:$0xf]
    %v102 = vld [vmem:[#allocation3 + $0xc4] sm:$0xf]
    %v103 = vld [vmem:[#allocation3 + $0xc8] sm:$0xf]
    %v104 = vld [vmem:[#allocation3 + $0xcc] sm:$0xf]
    %v105 = vld [vmem:[#allocation3 + $0xd0] sm:$0xf]
    %v106 = vld [vmem:[#allocation3 + $0xd4] sm:$0xf]
    %v107 = vld [vmem:[#allocation3 + $0xd8] sm:$0xf]
    %v108 = vld [vmem:[#allocation3 + $0xdc] sm:$0xf]
    %v109 = vld [vmem:[#allocation3 + $0xe0] sm:$0xf]
    %v110 = vld [vmem:[#allocation3 + $0xe4] sm:$0xf]
    %v111 = vld [vmem:[#allocation3 + $0xe8] sm:$0xf]
    %v112 = vld [vmem:[#allocation3 + $0xec] sm:$0xf]
    %v113 = vld [vmem:[#allocation3 + $0xf0] sm:$0xf]
    %v114 = vld [vmem:[#allocation3 + $0xf4] sm:$0xf]
    %v115 = vld [vmem:[#allocation3 + $0xf8] sm:$0xf]
    %v116 = vld [vmem:[#allocation3 + $0xfc] sm:$0xf]
    %v117 = vld [vmem:[#allocation3 + $0x100] sm:$0xf]
    %v118 = vld [vmem:[#allocation3 + $0x104] sm:$0xf]
    %v119 = vld [vmem:[#allocation3 + $0x108] sm:$0xf]
    %v120 = vld [vmem:[#allocation3 + $0x10c] sm:$0xf]
    %v121 = vld [vmem:[#allocation3 + $0x110] sm:$0xf]
    %v122 = vld [vmem:[#allocation3 + $0x114] sm:$0xf]
    %v123 = vld [vmem:[#allocation3 + $0x118] sm:$0xf]
    %v124 = vld [vmem:[#allocation3 + $0x11c] sm:$0xf]
    %v125 = vld [vmem:[#allocation3 + $0x120] sm:$0xf]
    %v126 = vld [vmem:[#allocation3 + $0x124] sm:$0xf]
    %v127 = vld [vmem:[#allocation3 + $0x128] sm:$0xf]
    %v128 = vld [vmem:[#allocation3 + $0x12c] sm:$0xf]
    %v129 = vld [vmem:[#allocation3 + $0x130] sm:$0xf]
    %v130 = vld [vmem:[#allocation3 + $0x134] sm:$0xf]
    %v131 = vld [vmem:[#allocation3 + $0x138] sm:$0xf]
    %v132 = vld [vmem:[#allocation3 + $0x13c] sm:$0xf]
    %v133 = vld [vmem:[#allocation3 + $0x140] sm:$0xf]
    %v134 = vld [vmem:[#allocation3 + $0x144] sm:$0xf]
    %v135 = vld [vmem:[#allocation3 + $0x148] sm:$0xf]
    %v136 = vld [vmem:[#allocation3 + $0x14c] sm:$0xf]
    %v137 = vld [vmem:[#allocation3 + $0x150] sm:$0xf]
    %v138 = vld [vmem:[#allocation3 + $0x154] sm:$0xf]
    %v139 = vld [vmem:[#allocation3 + $0x158] sm:$0xf]
    %v140 = vld [vmem:[#allocation3 + $0x15c] sm:$0xf]
    %v141 = vld [vmem:[#allocation3 + $0x160] sm:$0xf]
    %v142 = vld [vmem:[#allocation3 + $0x164] sm:$0xf]
    %v143 = vld [vmem:[#allocation3 + $0x168] sm:$0xf]
    %v144 = vld [vmem:[#allocation3 + $0x16c] sm:$0xf]
    %v145 = vld [vmem:[#allocation3 + $0x170] sm:$0xf]
    %v146 = vld [vmem:[#allocation3 + $0x174] sm:$0xf]
    %v147 = vld [vmem:[#allocation3 + $0x178] sm:$0xf]
    %v148 = vld [vmem:[#allocation3 + $0x17c] sm:$0xf]
    %v149 = vld [vmem:[#allocation3 + $0x180] sm:$0xf]
    %v150 = vld [vmem:[#allocation3 + $0x184] sm:$0xf]
    %v151 = vld [vmem:[#allocation3 + $0x188] sm:$0xf]
    %v152 = vld [vmem:[#allocation3 + $0x18c] sm:$0xf]
    %v153 = vld [vmem:[#allocation3 + $0x190] sm:$0xf]
    %v154 = vld [vmem:[#allocation3 + $0x194] sm:$0xf]
    %v155 = vld [vmem:[#allocation3 + $0x198] sm:$0xf]
    %v156 = vld [vmem:[#allocation3 + $0x19c] sm:$0xf]
    %v157 = vld [vmem:[#allocation3 + $0x1a0] sm:$0xf]
    %v158 = vld [vmem:[#allocation3 + $0x1a4] sm:$0xf]
    %v159 = vld [vmem:[#allocation3 + $0x1a8] sm:$0xf]
    %v160 = vld [vmem:[#allocation3 + $0x1ac] sm:$0xf]
    %v161 = vld [vmem:[#allocation3 + $0x1b0] sm:$0xf]
    %v162 = vld [vmem:[#allocation3 + $0x1b4] sm:$0xf]
    %v163 = vld [vmem:[#allocation3 + $0x1b8] sm:$0xf]
    %v164 = vld [vmem:[#allocation3 + $0x1bc] sm:$0xf]
    %v165 = vld [vmem:[#allocation3 + $0x1c0] sm:$0xf]
    %v166 = vld [vmem:[#allocation3 + $0x1c4] sm:$0xf]
    %v167 = vld [vmem:[#allocation3 + $0x1c8] sm:$0xf]
    %v168 = vld [vmem:[#allocation3 + $0x1cc] sm:$0xf]
    %v169 = vld [vmem:[#allocation3 + $0x1d0] sm:$0xf]
    %v170 = vld [vmem:[#allocation3 + $0x1d4] sm:$0xf]
    %v171 = vld [vmem:[#allocation3 + $0x1d8] sm:$0xf]
    %v172 = vld [vmem:[#allocation3 + $0x1dc] sm:$0xf]
    %v173 = vld [vmem:[#allocation3 + $0x1e0] sm:$0xf]
    %v174 = vld [vmem:[#allocation3 + $0x1e4] sm:$0xf]
    %v175 = vld [vmem:[#allocation3 + $0x1e8] sm:$0xf]
    %v176 = vld [vmem:[#allocation3 + $0x1ec] sm:$0xf]
    %v177 = vld [vmem:[#allocation3 + $0x1f0] sm:$0xf]
    %v178 = vld [vmem:[#allocation3 + $0x1f4] sm:$0xf]
    %v179 = vld [vmem:[#allocation3 + $0x1f8] sm:$0xf]
    %v180 = vld [vmem:[#allocation3 + $0x1fc] sm:$0xf]
    %v181 = vld [vmem:[#allocation3 + $0x200] sm:$0xf]
    %v182 = vld [vmem:[#allocation3 + $0x204] sm:$0xf]
    %v183 = vld [vmem:[#allocation3 + $0x208] sm:$0xf]
    %v184 = vld [vmem:[#allocation3 + $0x20c] sm:$0xf]
    %v185 = vld [vmem:[#allocation3 + $0x210] sm:$0xf]
    %v186 = vld [vmem:[#allocation3 + $0x214] sm:$0xf]
    %v187 = vld [vmem:[#allocation3 + $0x218] sm:$0xf]
    %v188 = vld [vmem:[#allocation3 + $0x21c] sm:$0xf]
    %v189 = vld [vmem:[#allocation3 + $0x220] sm:$0xf]
    %v190 = vld [vmem:[#allocation3 + $0x224] sm:$0xf]
    %v191 = vld [vmem:[#allocation3 + $0x228] sm:$0xf]
    %v192 = vld [vmem:[#allocation3 + $0x22c] sm:$0xf]
    %v193 = vld [vmem:[#allocation3 + $0x230] sm:$0xf]
    %v194 = vld [vmem:[#allocation3 + $0x234] sm:$0xf]
    %v195 = vld [vmem:[#allocation3 + $0x238] sm:$0xf]
    %v196 = vld [vmem:[#allocation3 + $0x23c] sm:$0xf]
    %v197 = vld [vmem:[#allocation3 + $0x240] sm:$0xf]
    %v198 = vld [vmem:[#allocation3 + $0x244] sm:$0xf]
    %v199 = vld [vmem:[#allocation3 + $0x248] sm:$0xf]
    %v200 = vld [vmem:[#allocation3 + $0x24c] sm:$0xf]
    %v201 = vld [vmem:[#allocation3 + $0x250] sm:$0xf]
    %v202 = vld [vmem:[#allocation3 + $0x254] sm:$0xf]
    %v203 = vld [vmem:[#allocation3 + $0x258] sm:$0xf]
    %v204 = vld [vmem:[#allocation3 + $0x25c] sm:$0xf]
    %v205 = vld [vmem:[#allocation3 + $0x260] sm:$0xf]
    %v206 = vld [vmem:[#allocation3 + $0x264] sm:$0xf]
    %v207 = vld [vmem:[#allocation3 + $0x268] sm:$0xf]
    %v208 = vld [vmem:[#allocation3 + $0x26c] sm:$0xf]
    %v209 = vld [vmem:[#allocation3 + $0x270] sm:$0xf]
    %v210 = vld [vmem:[#allocation3 + $0x274] sm:$0xf]
    %v211 = vld [vmem:[#allocation3 + $0x278] sm:$0xf]
    %v212 = vld [vmem:[#allocation3 + $0x27c] sm:$0xf]
    %v213 = vld [vmem:[#allocation3 + $0x280] sm:$0xf]
    %v214 = vld [vmem:[#allocation3 + $0x284] sm:$0xf]
    %v215 = vld [vmem:[#allocation3 + $0x288] sm:$0xf]
    %v216 = vld [vmem:[#allocation3 + $0x28c] sm:$0xf]
    %v217 = vld [vmem:[#allocation3 + $0x290] sm:$0xf]
    %v218 = vld [vmem:[#allocation3 + $0x294] sm:$0xf]
    %v219 = vld [vmem:[#allocation3 + $0x298] sm:$0xf]
    %v220 = vld [vmem:[#allocation3 + $0x29c] sm:$0xf]
    %v221 = vld [vmem:[#allocation3 + $0x2a0] sm:$0xf]
    %v222 = vld [vmem:[#allocation3 + $0x2a4] sm:$0xf]
    %v223 = vld [vmem:[#allocation3 + $0x2a8] sm:$0xf]
    %v224 = vld [vmem:[#allocation3 + $0x2ac] sm:$0xf]
    %v225 = vld [vmem:[#allocation3 + $0x2b0] sm:$0xf]
    %v226 = vld [vmem:[#allocation3 + $0x2b4] sm:$0xf]
    %v227 = vld [vmem:[#allocation3 + $0x2b8] sm:$0xf]
    %v228 = vld [vmem:[#allocation3 + $0x2bc] sm:$0xf]
    %v229 = vld [vmem:[#allocation3 + $0x2c0] sm:$0xf]
    %v230 = vld [vmem:[#allocation3 + $0x2c4] sm:$0xf]
    %v231 = vld [vmem:[#allocation3 + $0x2c8] sm:$0xf]
    %v232 = vld [vmem:[#allocation3 + $0x2cc] sm:$0xf]
    %v233 = vld [vmem:[#allocation3 + $0x2d0] sm:$0xf]
    %v234 = vld [vmem:[#allocation3 + $0x2d4] sm:$0xf]
    %v235 = vld [vmem:[#allocation3 + $0x2d8] sm:$0xf]
    %v236 = vld [vmem:[#allocation3 + $0x2dc] sm:$0xf]
    %v237 = vld [vmem:[#allocation3 + $0x2e0] sm:$0xf]
    %v238 = vld [vmem:[#allocation3 + $0x2e4] sm:$0xf]
    %v239 = vld [vmem:[#allocation3 + $0x2e8] sm:$0xf]
    %v240 = vld [vmem:[#allocation3 + $0x2ec] sm:$0xf]
    %v241 = vld [vmem:[#allocation3 + $0x2f0] sm:$0xf]
    %v242 = vld [vmem:[#allocation3 + $0x2f4] sm:$0xf]
    %v243 = vld [vmem:[#allocation3 + $0x2f8] sm:$0xf]
    %v244 = vld [vmem:[#allocation3 + $0x2fc] sm:$0xf]
    %v251 = vunpack.c.l.b16 %v47
    %v252 = vunpack.c.h.b16 %v47
    %v253 = vunpack.c.l.b16 %v48
    %v254 = vunpack.c.h.b16 %v48
    %v255 = vunpack.c.l.b16 %v49
    %v256 = vunpack.c.h.b16 %v49
    %v257 = vunpack.c.l.b16 %v50
    %v258 = vunpack.c.h.b16 %v50
    %v259 = vunpack.c.l.b16 %v51
    %v260 = vunpack.c.h.b16 %v51
    %v261 = vunpack.c.l.b16 %v52
    %v262 = vunpack.c.h.b16 %v52
    %v263 = vpack.c.b16 %v251, %v251
    %v264 = vpack.c.b16 %v252, %v252
    %v265 = vpack.c.b16 %v253, %v253
    %v266 = vpack.c.b16 %v254, %v254
    %v267 = vpack.c.b16 %v255, %v255
    %v268 = vpack.c.b16 %v256, %v256
    %v269 = vpack.c.b16 %v257, %v257
    %v270 = vpack.c.b16 %v258, %v258
    %v271 = vpack.c.b16 %v259, %v259
    %v272 = vpack.c.b16 %v260, %v260
    %v273 = vpack.c.b16 %v261, %v261
    %v274 = vpack.c.b16 %v262, %v262
    %v479 = vunpack.c.l.b16 %v53
    %v480 = vunpack.c.l.b16 %v54
    %v481 = vunpack.c.l.b16 %v55
    %v482 = vunpack.c.l.b16 %v56
    %v483 = vunpack.c.l.b16 %v57
    %v484 = vunpack.c.l.b16 %v58
    %v485 = vunpack.c.l.b16 %v59
    %v486 = vunpack.c.l.b16 %v60
    %v487 = vunpack.c.l.b16 %v61
    %v488 = vunpack.c.l.b16 %v62
    %v489 = vunpack.c.l.b16 %v63
    %v490 = vunpack.c.l.b16 %v64
    %v491 = vunpack.c.l.b16 %v65
    %v492 = vunpack.c.l.b16 %v66
    %v493 = vunpack.c.l.b16 %v67
    %v494 = vunpack.c.l.b16 %v68
    %v495 = vunpack.c.l.b16 %v69
    %v496 = vunpack.c.l.b16 %v70
    %v497 = vunpack.c.l.b16 %v71
    %v498 = vunpack.c.l.b16 %v72
    %v499 = vunpack.c.l.b16 %v73
    %v500 = vunpack.c.l.b16 %v74
    %v501 = vunpack.c.l.b16 %v75
    %v502 = vunpack.c.l.b16 %v76
    %v503 = vunpack.c.l.b16 %v77
    %v504 = vunpack.c.l.b16 %v78
    %v505 = vunpack.c.l.b16 %v79
    %v506 = vunpack.c.l.b16 %v80
    %v507 = vunpack.c.l.b16 %v81
    %v508 = vunpack.c.l.b16 %v82
    %v509 = vunpack.c.l.b16 %v83
    %v510 = vunpack.c.l.b16 %v84
    %v511 = vunpack.c.l.b16 %v85
    %v512 = vunpack.c.l.b16 %v86
    %v513 = vunpack.c.l.b16 %v87
    %v514 = vunpack.c.l.b16 %v88
    %v515 = vunpack.c.l.b16 %v89
    %v516 = vunpack.c.l.b16 %v90
    %v517 = vunpack.c.l.b16 %v91
    %v518 = vunpack.c.l.b16 %v92
    %v519 = vunpack.c.l.b16 %v93
    %v520 = vunpack.c.l.b16 %v94
    %v521 = vunpack.c.l.b16 %v95
    %v522 = vunpack.c.l.b16 %v96
    %v523 = vunpack.c.l.b16 %v97
    %v524 = vunpack.c.l.b16 %v98
    %v525 = vunpack.c.l.b16 %v99
    %v526 = vunpack.c.l.b16 %v100
    %v527 = vunpack.c.l.b16 %v101
    %v528 = vunpack.c.l.b16 %v102
    %v529 = vunpack.c.l.b16 %v103
    %v530 = vunpack.c.l.b16 %v104
    %v531 = vunpack.c.l.b16 %v105
    %v532 = vunpack.c.l.b16 %v106
    %v533 = vunpack.c.l.b16 %v107
    %v534 = vunpack.c.l.b16 %v108
    %v535 = vunpack.c.l.b16 %v109
    %v536 = vunpack.c.l.b16 %v110
    %v537 = vunpack.c.l.b16 %v111
    %v538 = vunpack.c.l.b16 %v112
    %v539 = vunpack.c.l.b16 %v113
    %v540 = vunpack.c.l.b16 %v114
    %v541 = vunpack.c.l.b16 %v115
    %v542 = vunpack.c.l.b16 %v116
    %v543 = vunpack.c.l.b16 %v117
    %v544 = vunpack.c.l.b16 %v118
    %v545 = vunpack.c.l.b16 %v119
    %v546 = vunpack.c.l.b16 %v120
    %v547 = vunpack.c.l.b16 %v121
    %v548 = vunpack.c.l.b16 %v122
    %v549 = vunpack.c.l.b16 %v123
    %v550 = vunpack.c.l.b16 %v124
    %v551 = vunpack.c.l.b16 %v125
    %v552 = vunpack.c.l.b16 %v126
    %v553 = vunpack.c.l.b16 %v127
    %v554 = vunpack.c.l.b16 %v128
    %v555 = vunpack.c.l.b16 %v129
    %v556 = vunpack.c.l.b16 %v130
    %v557 = vunpack.c.l.b16 %v131
    %v558 = vunpack.c.l.b16 %v132
    %v559 = vunpack.c.l.b16 %v133
    %v560 = vunpack.c.l.b16 %v134
    %v561 = vunpack.c.l.b16 %v135
    %v562 = vunpack.c.l.b16 %v136
    %v563 = vunpack.c.l.b16 %v137
    %v564 = vunpack.c.l.b16 %v138
    %v565 = vunpack.c.l.b16 %v139
    %v566 = vunpack.c.l.b16 %v140
    %v567 = vunpack.c.l.b16 %v141
    %v568 = vunpack.c.l.b16 %v142
    %v569 = vunpack.c.l.b16 %v143
    %v570 = vunpack.c.l.b16 %v144
    %v571 = vunpack.c.l.b16 %v145
    %v572 = vunpack.c.l.b16 %v146
    %v573 = vunpack.c.l.b16 %v147
    %v574 = vunpack.c.l.b16 %v148
    %v575 = vunpack.c.l.b16 %v149
    %v576 = vunpack.c.l.b16 %v150
    %v577 = vunpack.c.l.b16 %v151
    %v578 = vunpack.c.l.b16 %v152
    %v579 = vunpack.c.l.b16 %v153
    %v580 = vunpack.c.l.b16 %v154
    %v581 = vunpack.c.l.b16 %v155
    %v582 = vunpack.c.l.b16 %v156
    %v583 = vunpack.c.l.b16 %v157
    %v584 = vunpack.c.l.b16 %v158
    %v585 = vunpack.c.l.b16 %v159
    %v586 = vunpack.c.l.b16 %v160
    %v587 = vunpack.c.l.b16 %v161
    %v588 = vunpack.c.l.b16 %v162
    %v589 = vunpack.c.l.b16 %v163
    %v590 = vunpack.c.l.b16 %v164
    %v591 = vunpack.c.l.b16 %v165
    %v592 = vunpack.c.l.b16 %v166
    %v593 = vunpack.c.l.b16 %v167
    %v594 = vunpack.c.l.b16 %v168
    %v595 = vunpack.c.l.b16 %v169
    %v596 = vunpack.c.l.b16 %v170
    %v597 = vunpack.c.l.b16 %v171
    %v598 = vunpack.c.l.b16 %v172
    %v599 = vunpack.c.l.b16 %v173
    %v600 = vunpack.c.l.b16 %v174
    %v601 = vunpack.c.l.b16 %v175
    %v602 = vunpack.c.l.b16 %v176
    %v603 = vunpack.c.l.b16 %v177
    %v604 = vunpack.c.l.b16 %v178
    %v605 = vunpack.c.l.b16 %v179
    %v606 = vunpack.c.l.b16 %v180
    %v607 = vunpack.c.l.b16 %v181
    %v608 = vunpack.c.l.b16 %v182
    %v609 = vunpack.c.l.b16 %v183
    %v610 = vunpack.c.l.b16 %v184
    %v611 = vunpack.c.l.b16 %v185
    %v612 = vunpack.c.l.b16 %v186
    %v613 = vunpack.c.l.b16 %v187
    %v614 = vunpack.c.l.b16 %v188
    %v615 = vunpack.c.l.b16 %v189
    %v616 = vunpack.c.l.b16 %v190
    %v617 = vunpack.c.l.b16 %v191
    %v618 = vunpack.c.l.b16 %v192
    %v619 = vunpack.c.l.b16 %v193
    %v620 = vunpack.c.l.b16 %v194
    %v621 = vunpack.c.l.b16 %v195
    %v622 = vunpack.c.l.b16 %v196
    %v623 = vunpack.c.l.b16 %v197
    %v624 = vunpack.c.l.b16 %v198
    %v625 = vunpack.c.l.b16 %v199
    %v626 = vunpack.c.l.b16 %v200
    %v627 = vunpack.c.l.b16 %v201
    %v628 = vunpack.c.l.b16 %v202
    %v629 = vunpack.c.l.b16 %v203
    %v630 = vunpack.c.l.b16 %v204
    %v631 = vunpack.c.l.b16 %v205
    %v632 = vunpack.c.l.b16 %v206
    %v633 = vunpack.c.l.b16 %v207
    %v634 = vunpack.c.l.b16 %v208
    %v635 = vunpack.c.l.b16 %v209
    %v636 = vunpack.c.l.b16 %v210
    %v637 = vunpack.c.l.b16 %v211
    %v638 = vunpack.c.l.b16 %v212
    %v639 = vunpack.c.l.b16 %v213
    %v640 = vunpack.c.l.b16 %v214
    %v641 = vunpack.c.l.b16 %v215
    %v642 = vunpack.c.l.b16 %v216
    %v643 = vunpack.c.l.b16 %v217
    %v644 = vunpack.c.l.b16 %v218
    %v645 = vunpack.c.l.b16 %v219
    %v646 = vunpack.c.l.b16 %v220
    %v647 = vunpack.c.l.b16 %v221
    %v648 = vunpack.c.l.b16 %v222
    %v649 = vunpack.c.l.b16 %v223
    %v650 = vunpack.c.l.b16 %v224
    %v651 = vunpack.c.l.b16 %v225
    %v652 = vunpack.c.l.b16 %v226
    %v653 = vunpack.c.l.b16 %v227
    %v654 = vunpack.c.l.b16 %v228
    %v655 = vunpack.c.l.b16 %v229
    %v656 = vunpack.c.l.b16 %v230
    %v657 = vunpack.c.l.b16 %v231
    %v658 = vunpack.c.l.b16 %v232
    %v659 = vunpack.c.l.b16 %v233
    %v660 = vunpack.c.l.b16 %v234
    %v661 = vunpack.c.l.b16 %v235
    %v662 = vunpack.c.l.b16 %v236
    %v663 = vunpack.c.l.b16 %v237
    %v664 = vunpack.c.l.b16 %v238
    %v665 = vunpack.c.l.b16 %v239
    %v666 = vunpack.c.l.b16 %v240
    %v667 = vunpack.c.l.b16 %v241
    %v668 = vunpack.c.l.b16 %v242
    %v669 = vunpack.c.l.b16 %v243
    %v670 = vunpack.c.l.b16 %v244
    %v671 = vpack.c.b16 %v480, %v479
    %v672 = vpack.c.b16 %v482, %v481
    %v673 = vpack.c.b16 %v484, %v483
    %v674 = vpack.c.b16 %v486, %v485
    %v675 = vpack.c.b16 %v488, %v487
    %v676 = vpack.c.b16 %v490, %v489
    %v677 = vpack.c.b16 %v492, %v491
    %v678 = vpack.c.b16 %v494, %v493
    %v679 = vpack.c.b16 %v496, %v495
    %v680 = vpack.c.b16 %v498, %v497
    %v681 = vpack.c.b16 %v500, %v499
    %v682 = vpack.c.b16 %v502, %v501
    %v683 = vpack.c.b16 %v504, %v503
    %v684 = vpack.c.b16 %v506, %v505
    %v685 = vpack.c.b16 %v508, %v507
    %v686 = vpack.c.b16 %v510, %v509
    %v687 = vpack.c.b16 %v512, %v511
    %v688 = vpack.c.b16 %v514, %v513
    %v689 = vpack.c.b16 %v516, %v515
    %v690 = vpack.c.b16 %v518, %v517
    %v691 = vpack.c.b16 %v520, %v519
    %v692 = vpack.c.b16 %v522, %v521
    %v693 = vpack.c.b16 %v524, %v523
    %v694 = vpack.c.b16 %v526, %v525
    %v695 = vpack.c.b16 %v528, %v527
    %v696 = vpack.c.b16 %v530, %v529
    %v697 = vpack.c.b16 %v532, %v531
    %v698 = vpack.c.b16 %v534, %v533
    %v699 = vpack.c.b16 %v536, %v535
    %v700 = vpack.c.b16 %v538, %v537
    %v701 = vpack.c.b16 %v540, %v539
    %v702 = vpack.c.b16 %v542, %v541
    %v703 = vpack.c.b16 %v544, %v543
    %v704 = vpack.c.b16 %v546, %v545
    %v705 = vpack.c.b16 %v548, %v547
    %v706 = vpack.c.b16 %v550, %v549
    %v707 = vpack.c.b16 %v552, %v551
    %v708 = vpack.c.b16 %v554, %v553
    %v709 = vpack.c.b16 %v556, %v555
    %v710 = vpack.c.b16 %v558, %v557
    %v711 = vpack.c.b16 %v560, %v559
    %v712 = vpack.c.b16 %v562, %v561
    %v713 = vpack.c.b16 %v564, %v563
    %v714 = vpack.c.b16 %v566, %v565
    %v715 = vpack.c.b16 %v568, %v567
    %v716 = vpack.c.b16 %v570, %v569
    %v717 = vpack.c.b16 %v572, %v571
    %v718 = vpack.c.b16 %v574, %v573
    %v719 = vpack.c.b16 %v576, %v575
    %v720 = vpack.c.b16 %v578, %v577
    %v721 = vpack.c.b16 %v580, %v579
    %v722 = vpack.c.b16 %v582, %v581
    %v723 = vpack.c.b16 %v584, %v583
    %v724 = vpack.c.b16 %v586, %v585
    %v725 = vpack.c.b16 %v588, %v587
    %v726 = vpack.c.b16 %v590, %v589
    %v727 = vpack.c.b16 %v592, %v591
    %v728 = vpack.c.b16 %v594, %v593
    %v729 = vpack.c.b16 %v596, %v595
    %v730 = vpack.c.b16 %v598, %v597
    %v731 = vpack.c.b16 %v600, %v599
    %v732 = vpack.c.b16 %v602, %v601
    %v733 = vpack.c.b16 %v604, %v603
    %v734 = vpack.c.b16 %v606, %v605
    %v735 = vpack.c.b16 %v608, %v607
    %v736 = vpack.c.b16 %v610, %v609
    %v737 = vpack.c.b16 %v612, %v611
    %v738 = vpack.c.b16 %v614, %v613
    %v739 = vpack.c.b16 %v616, %v615
    %v740 = vpack.c.b16 %v618, %v617
    %v741 = vpack.c.b16 %v620, %v619
    %v742 = vpack.c.b16 %v622, %v621
    %v743 = vpack.c.b16 %v624, %v623
    %v744 = vpack.c.b16 %v626, %v625
    %v745 = vpack.c.b16 %v628, %v627
    %v746 = vpack.c.b16 %v630, %v629
    %v747 = vpack.c.b16 %v632, %v631
    %v748 = vpack.c.b16 %v634, %v633
    %v749 = vpack.c.b16 %v636, %v635
    %v750 = vpack.c.b16 %v638, %v637
    %v751 = vpack.c.b16 %v640, %v639
    %v752 = vpack.c.b16 %v642, %v641
    %v753 = vpack.c.b16 %v644, %v643
    %v754 = vpack.c.b16 %v646, %v645
    %v755 = vpack.c.b16 %v648, %v647
    %v756 = vpack.c.b16 %v650, %v649
    %v757 = vpack.c.b16 %v652, %v651
    %v758 = vpack.c.b16 %v654, %v653
    %v759 = vpack.c.b16 %v656, %v655
    %v760 = vpack.c.b16 %v658, %v657
    %v761 = vpack.c.b16 %v660, %v659
    %v762 = vpack.c.b16 %v662, %v661
    %v763 = vpack.c.b16 %v664, %v663
    %v764 = vpack.c.b16 %v666, %v665
    %v765 = vpack.c.b16 %v668, %v667
    %v766 = vpack.c.b16 %v670, %v669
    %863 = vmatprep.subr.bf16.mxu0 0
    %864 = vmatpush1.bf16.msra.mxu0 %v671
    %865 = vmatprep.subr.bf16.mxu0 0
    %866 = vmatpush1.bf16.msra.mxu0 %v672
    %867 = vmatprep.subr.bf16.mxu0 0
    %868 = vmatpush1.bf16.msra.mxu0 %v673
    %869 = vmatprep.subr.bf16.mxu0 0
    %870 = vmatpush1.bf16.msra.mxu0 %v674
    %871 = vmatprep.subr.bf16.mxu0 0
    %872 = vmatpush1.bf16.msra.mxu0 %v675
    %873 = vmatprep.subr.bf16.mxu0 0
    %874 = vmatpush1.bf16.msra.mxu0 %v676
    %875 = vmatprep.subr.bf16.mxu0 0
    %876 = vmatpush1.bf16.msra.mxu0 %v677
    %877 = vmatprep.subr.bf16.mxu0 0
    %878 = vmatpush1.bf16.msra.mxu0 %v678
    %879 = vmatprep.subr.bf16.mxu0 0
    %880 = vmatpush1.bf16.msra.mxu0 %v679
    %881 = vmatprep.subr.bf16.mxu0 0
    %882 = vmatpush1.bf16.msra.mxu0 %v680
    %883 = vmatprep.subr.bf16.mxu0 0
    %884 = vmatpush1.bf16.msra.mxu0 %v681
    %885 = vmatprep.subr.bf16.mxu0 0
    %886 = vmatpush1.bf16.msra.mxu0 %v682
    %887 = vmatprep.subr.bf16.mxu0 0
    %888 = vmatpush1.bf16.msra.mxu0 %v683
    %889 = vmatprep.subr.bf16.mxu0 0
    %890 = vmatpush1.bf16.msra.mxu0 %v684
    %891 = vmatprep.subr.bf16.mxu0 0
    %892 = vmatpush1.bf16.msra.mxu0 %v685
    %893 = vmatprep.subr.bf16.mxu0 0
    %894 = vmatpush1.bf16.msra.mxu0 %v686
    %895 = vmatprep.mubr.bf16.mxu0 %v264
    %896 = vmatmul.mubr.bf16.gmra.mrb[0].mxu0 %v263
    %v897 = vpop.f32.mrb[0].mxu0
    %v898 = vadd.f32 0.0, %v897
    %v899 = vpop.f32.mrb[0].mxu0
    %v900 = vpop.f32.mrb[0].mxu0
    %v901 = vpop.f32.mrb[0].mxu0
    %902 = vdwg.mxu0
    %903 = vmatprep.subr.bf16.mxu0 0
    %904 = vmatpush1.bf16.msra.mxu0 %v687
    %905 = vmatprep.subr.bf16.mxu0 0
    %906 = vmatpush1.bf16.msra.mxu0 %v688
    %907 = vmatprep.subr.bf16.mxu0 0
    %908 = vmatpush1.bf16.msra.mxu0 %v689
    %909 = vmatprep.subr.bf16.mxu0 0
    %910 = vmatpush1.bf16.msra.mxu0 %v690
    %911 = vmatprep.subr.bf16.mxu0 0
    %912 = vmatpush1.bf16.msra.mxu0 %v691
    %913 = vmatprep.subr.bf16.mxu0 0
    %914 = vmatpush1.bf16.msra.mxu0 %v692
    %915 = vmatprep.subr.bf16.mxu0 0
    %916 = vmatpush1.bf16.msra.mxu0 %v693
    %917 = vmatprep.subr.bf16.mxu0 0
    %918 = vmatpush1.bf16.msra.mxu0 %v694
    %919 = vmatprep.subr.bf16.mxu0 0
    %920 = vmatpush1.bf16.msra.mxu0 %v695
    %921 = vmatprep.subr.bf16.mxu0 0
    %922 = vmatpush1.bf16.msra.mxu0 %v696
    %923 = vmatprep.subr.bf16.mxu0 0
    %924 = vmatpush1.bf16.msra.mxu0 %v697
    %925 = vmatprep.subr.bf16.mxu0 0
    %926 = vmatpush1.bf16.msra.mxu0 %v698
    %927 = vmatprep.subr.bf16.mxu0 0
    %928 = vmatpush1.bf16.msra.mxu0 %v699
    %929 = vmatprep.subr.bf16.mxu0 0
    %930 = vmatpush1.bf16.msra.mxu0 %v700
    %931 = vmatprep.subr.bf16.mxu0 0
    %932 = vmatpush1.bf16.msra.mxu0 %v701
    %933 = vmatprep.subr.bf16.mxu0 0
    %934 = vmatpush1.bf16.msra.mxu0 %v702
    %935 = vmatprep.mubr.bf16.mxu0 %v266
    %936 = vmatmul.mubr.bf16.gmra.mrb[0].mxu0 %v265
    %v937 = vpop.f32.mrb[0].mxu0
    %v938 = vadd.f32 %v898, %v937
    %v939 = vpop.f32.mrb[0].mxu0
    %v940 = vpop.f32.mrb[0].mxu0
    %v941 = vpop.f32.mrb[0].mxu0
    %942 = vdwg.mxu0
    %943 = vmatprep.subr.bf16.mxu0 0
    %944 = vmatpush1.bf16.msra.mxu0 %v703
    %945 = vmatprep.subr.bf16.mxu0 0
    %946 = vmatpush1.bf16.msra.mxu0 %v704
    %947 = vmatprep.subr.bf16.mxu0 0
    %948 = vmatpush1.bf16.msra.mxu0 %v705
    %949 = vmatprep.subr.bf16.mxu0 0
    %950 = vmatpush1.bf16.msra.mxu0 %v706
    %951 = vmatprep.subr.bf16.mxu0 0
    %952 = vmatpush1.bf16.msra.mxu0 %v707
    %953 = vmatprep.subr.bf16.mxu0 0
    %954 = vmatpush1.bf16.msra.mxu0 %v708
    %955 = vmatprep.subr.bf16.mxu0 0
    %956 = vmatpush1.bf16.msra.mxu0 %v709
    %957 = vmatprep.subr.bf16.mxu0 0
    %958 = vmatpush1.bf16.msra.mxu0 %v710
    %959 = vmatprep.subr.bf16.mxu0 0
    %960 = vmatpush1.bf16.msra.mxu0 %v711
    %961 = vmatprep.subr.bf16.mxu0 0
    %962 = vmatpush1.bf16.msra.mxu0 %v712
    %963 = vmatprep.subr.bf16.mxu0 0
    %964 = vmatpush1.bf16.msra.mxu0 %v713
    %965 = vmatprep.subr.bf16.mxu0 0
    %966 = vmatpush1.bf16.msra.mxu0 %v714
    %967 = vmatprep.subr.bf16.mxu0 0
    %968 = vmatpush1.bf16.msra.mxu0 %v715
    %969 = vmatprep.subr.bf16.mxu0 0
    %970 = vmatpush1.bf16.msra.mxu0 %v716
    %971 = vmatprep.subr.bf16.mxu0 0
    %972 = vmatpush1.bf16.msra.mxu0 %v717
    %973 = vmatprep.subr.bf16.mxu0 0
    %974 = vmatpush1.bf16.msra.mxu0 %v718
    %975 = vmatprep.mubr.bf16.mxu0 %v268
    %976 = vmatmul.mubr.bf16.gmra.mrb[0].mxu0 %v267
    %v977 = vpop.f32.mrb[0].mxu0
    %v978 = vadd.f32 %v938, %v977
    %v979 = vpop.f32.mrb[0].mxu0
    %v980 = vpop.f32.mrb[0].mxu0
    %v981 = vpop.f32.mrb[0].mxu0
    %982 = vdwg.mxu0
    %983 = vmatprep.subr.bf16.mxu0 0
    %984 = vmatpush1.bf16.msra.mxu0 %v719
    %985 = vmatprep.subr.bf16.mxu0 0
    %986 = vmatpush1.bf16.msra.mxu0 %v720
    %987 = vmatprep.subr.bf16.mxu0 0
    %988 = vmatpush1.bf16.msra.mxu0 %v721
    %989 = vmatprep.subr.bf16.mxu0 0
    %990 = vmatpush1.bf16.msra.mxu0 %v722
    %991 = vmatprep.subr.bf16.mxu0 0
    %992 = vmatpush1.bf16.msra.mxu0 %v723
    %993 = vmatprep.subr.bf16.mxu0 0
    %994 = vmatpush1.bf16.msra.mxu0 %v724
    %995 = vmatprep.subr.bf16.mxu0 0
    %996 = vmatpush1.bf16.msra.mxu0 %v725
    %997 = vmatprep.subr.bf16.mxu0 0
    %998 = vmatpush1.bf16.msra.mxu0 %v726
    %999 = vmatprep.subr.bf16.mxu0 0
    %1000 = vmatpush1.bf16.msra.mxu0 %v727
    %1001 = vmatprep.subr.bf16.mxu0 0
    %1002 = vmatpush1.bf16.msra.mxu0 %v728
    %1003 = vmatprep.subr.bf16.mxu0 0
    %1004 = vmatpush1.bf16.msra.mxu0 %v729
    %1005 = vmatprep.subr.bf16.mxu0 0
    %1006 = vmatpush1.bf16.msra.mxu0 %v730
    %1007 = vmatprep.subr.bf16.mxu0 0
    %1008 = vmatpush1.bf16.msra.mxu0 %v731
    %1009 = vmatprep.subr.bf16.mxu0 0
    %1010 = vmatpush1.bf16.msra.mxu0 %v732
    %1011 = vmatprep.subr.bf16.mxu0 0
    %1012 = vmatpush1.bf16.msra.mxu0 %v733
    %1013 = vmatprep.subr.bf16.mxu0 0
    %1014 = vmatpush1.bf16.msra.mxu0 %v734
    %1015 = vmatprep.mubr.bf16.mxu0 %v270
    %1016 = vmatmul.mubr.bf16.gmra.mrb[0].mxu0 %v269
    %v1017 = vpop.f32.mrb[0].mxu0
    %v1018 = vadd.f32 %v978, %v1017
    %v1019 = vpop.f32.mrb[0].mxu0
    %v1020 = vpop.f32.mrb[0].mxu0
    %v1021 = vpop.f32.mrb[0].mxu0
    %1022 = vdwg.mxu0
    %1023 = vmatprep.subr.bf16.mxu0 0
    %1024 = vmatpush1.bf16.msra.mxu0 %v735
    %1025 = vmatprep.subr.bf16.mxu0 0
    %1026 = vmatpush1.bf16.msra.mxu0 %v736
    %1027 = vmatprep.subr.bf16.mxu0 0
    %1028 = vmatpush1.bf16.msra.mxu0 %v737
    %1029 = vmatprep.subr.bf16.mxu0 0
    %1030 = vmatpush1.bf16.msra.mxu0 %v738
    %1031 = vmatprep.subr.bf16.mxu0 0
    %1032 = vmatpush1.bf16.msra.mxu0 %v739
    %1033 = vmatprep.subr.bf16.mxu0 0
    %1034 = vmatpush1.bf16.msra.mxu0 %v740
    %1035 = vmatprep.subr.bf16.mxu0 0
    %1036 = vmatpush1.bf16.msra.mxu0 %v741
    %1037 = vmatprep.subr.bf16.mxu0 0
    %1038 = vmatpush1.bf16.msra.mxu0 %v742
    %1039 = vmatprep.subr.bf16.mxu0 0
    %1040 = vmatpush1.bf16.msra.mxu0 %v743
    %1041 = vmatprep.subr.bf16.mxu0 0
    %1042 = vmatpush1.bf16.msra.mxu0 %v744
    %1043 = vmatprep.subr.bf16.mxu0 0
    %1044 = vmatpush1.bf16.msra.mxu0 %v745
    %1045 = vmatprep.subr.bf16.mxu0 0
    %1046 = vmatpush1.bf16.msra.mxu0 %v746
    %1047 = vmatprep.subr.bf16.mxu0 0
    %1048 = vmatpush1.bf16.msra.mxu0 %v747
    %1049 = vmatprep.subr.bf16.mxu0 0
    %1050 = vmatpush1.bf16.msra.mxu0 %v748
    %1051 = vmatprep.subr.bf16.mxu0 0
    %1052 = vmatpush1.bf16.msra.mxu0 %v749
    %1053 = vmatprep.subr.bf16.mxu0 0
    %1054 = vmatpush1.bf16.msra.mxu0 %v750
    %1055 = vmatprep.mubr.bf16.mxu0 %v272
    %1056 = vmatmul.mubr.bf16.gmra.mrb[0].mxu0 %v271
    %v1057 = vpop.f32.mrb[0].mxu0
    %v1058 = vadd.f32 %v1018, %v1057
    %v1059 = vpop.f32.mrb[0].mxu0
    %v1060 = vpop.f32.mrb[0].mxu0
    %v1061 = vpop.f32.mrb[0].mxu0
    %1062 = vdwg.mxu0
    %1063 = vmatprep.subr.bf16.mxu0 0
    %1064 = vmatpush1.bf16.msra.mxu0 %v751
    %1065 = vmatprep.subr.bf16.mxu0 0
    %1066 = vmatpush1.bf16.msra.mxu0 %v752
    %1067 = vmatprep.subr.bf16.mxu0 0
    %1068 = vmatpush1.bf16.msra.mxu0 %v753
    %1069 = vmatprep.subr.bf16.mxu0 0
    %1070 = vmatpush1.bf16.msra.mxu0 %v754
    %1071 = vmatprep.subr.bf16.mxu0 0
    %1072 = vmatpush1.bf16.msra.mxu0 %v755
    %1073 = vmatprep.subr.bf16.mxu0 0
    %1074 = vmatpush1.bf16.msra.mxu0 %v756
    %1075 = vmatprep.subr.bf16.mxu0 0
    %1076 = vmatpush1.bf16.msra.mxu0 %v757
    %1077 = vmatprep.subr.bf16.mxu0 0
    %1078 = vmatpush1.bf16.msra.mxu0 %v758
    %1079 = vmatprep.subr.bf16.mxu0 0
    %1080 = vmatpush1.bf16.msra.mxu0 %v759
    %1081 = vmatprep.subr.bf16.mxu0 0
    %1082 = vmatpush1.bf16.msra.mxu0 %v760
    %1083 = vmatprep.subr.bf16.mxu0 0
    %1084 = vmatpush1.bf16.msra.mxu0 %v761
    %1085 = vmatprep.subr.bf16.mxu0 0
    %1086 = vmatpush1.bf16.msra.mxu0 %v762
    %1087 = vmatprep.subr.bf16.mxu0 0
    %1088 = vmatpush1.bf16.msra.mxu0 %v763
    %1089 = vmatprep.subr.bf16.mxu0 0
    %1090 = vmatpush1.bf16.msra.mxu0 %v764
    %1091 = vmatprep.subr.bf16.mxu0 0
    %1092 = vmatpush1.bf16.msra.mxu0 %v765
    %1093 = vmatprep.subr.bf16.mxu0 0
    %1094 = vmatpush1.bf16.msra.mxu0 %v766
    %1095 = vmatprep.mubr.bf16.mxu0 %v274
    %1096 = vmatmul.mubr.bf16.gmra.mrb[0].mxu0 %v273
    %v1097 = vpop.f32.mrb[0].mxu0
    %v1098 = vadd.f32 %v1058, %v1097
    %v1099 = vpop.f32.mrb[0].mxu0
    %v1100 = vpop.f32.mrb[0].mxu0
    %v1101 = vpop.f32.mrb[0].mxu0
    %1102 = vdwg.mxu0
    %v1103 = vadd.f32 %v46, %v1098
    %1104 = vst [vmem:[#allocation2] sm:$0xff] %v1103
    // Predicated region
    $region38: #{_forward.1} parent=1 // pred_check
      %p1105 = pneg %p41
    $region39: #{_forward.1} parent=1 // pred_check_branch
      %1107 = sbr.rel (%p1105) target = $region41
    $region40: #{_forward.1} parent=1 // pred_region
      %v1108 = vld [vmem:[#allocation2] sm:$0xff]
      %v1109 = vld [vmem:[%s2] sm:$0x1]
      %v1111 = vlaneseq
      %v1112 = vshrl.u32 %v1111, 7
      %v1113 = vsub.s32 0, %v1112
      %v1114 = vrot.slane %v1109, %v1113
      %v1116 = vadd.f32 %v1108, %v1114
      %v1117 = vmul.f32 %v1116, %v1116
      %v1118 = vmul.f32 %v1117, %v1116
      %v1119 = vpack.c.bf16 %v1118, %v1118
      %v1120 = vld [vmem:[%s3] sm:$0xff]
      %v1121 = vld [vmem:[%s3 + $0x8] sm:$0xff]
      %v1122 = vld [vmem:[%s3 + $0x10] sm:$0xff]
      %v1123 = vld [vmem:[%s3 + $0x18] sm:$0xff]
      %v1124 = vld [vmem:[%s3 + $0x20] sm:$0xff]
      %v1125 = vld [vmem:[%s3 + $0x28] sm:$0xff]
      %v1126 = vld [vmem:[%s3 + $0x30] sm:$0xff]
      %v1127 = vld [vmem:[%s3 + $0x38] sm:$0xff]
      %v1128 = vld [vmem:[%s3 + $0x40] sm:$0xff]
      %v1129 = vld [vmem:[%s3 + $0x48] sm:$0xff]
      %v1130 = vld [vmem:[%s3 + $0x50] sm:$0xff]
      %v1131 = vld [vmem:[%s3 + $0x58] sm:$0xff]
      %v1132 = vld [vmem:[%s3 + $0x60] sm:$0xff]
      %v1133 = vld [vmem:[%s3 + $0x68] sm:$0xff]
      %v1134 = vld [vmem:[%s3 + $0x70] sm:$0xff]
      %v1135 = vld [vmem:[%s3 + $0x78] sm:$0xff]
      %v1136 = vld [vmem:[%s4] sm:$0x3]
      %v1138 = vlaneseq
      %v1139 = vshrl.u32 %v1138, 7
      %v1140 = vsub.s32 0, %v1139
      %v1141 = vrot.slane %v1136, %v1140
      %v1142 = vlaneseq
      %v1143 = vshrl.u32 %v1142, 7
      %v1144 = vsub.s32 1, %v1143
      %v1145 = vrot.slane %v1136, %v1144
      %v1164 = vunpack.c.l.b16 %v1120
      %v1165 = vunpack.c.h.b16 %v1120
      %v1166 = vunpack.c.l.b16 %v1121
      %v1167 = vunpack.c.h.b16 %v1121
      %v1168 = vunpack.c.l.b16 %v1122
      %v1169 = vunpack.c.h.b16 %v1122
      %v1170 = vunpack.c.l.b16 %v1123
      %v1171 = vunpack.c.h.b16 %v1123
      %v1172 = vunpack.c.l.b16 %v1124
      %v1173 = vunpack.c.h.b16 %v1124
      %v1174 = vunpack.c.l.b16 %v1125
      %v1175 = vunpack.c.h.b16 %v1125
      %v1176 = vunpack.c.l.b16 %v1126
      %v1177 = vunpack.c.h.b16 %v1126
      %v1178 = vunpack.c.l.b16 %v1127
      %v1179 = vunpack.c.h.b16 %v1127
      %v1180 = vunpack.c.l.b16 %v1128
      %v1181 = vunpack.c.h.b16 %v1128
      %v1182 = vunpack.c.l.b16 %v1129
      %v1183 = vunpack.c.h.b16 %v1129
      %v1184 = vunpack.c.l.b16 %v1130
      %v1185 = vunpack.c.h.b16 %v1130
      %v1186 = vunpack.c.l.b16 %v1131
      %v1187 = vunpack.c.h.b16 %v1131
      %v1188 = vunpack.c.l.b16 %v1132
      %v1189 = vunpack.c.h.b16 %v1132
      %v1190 = vunpack.c.l.b16 %v1133
      %v1191 = vunpack.c.h.b16 %v1133
      %v1192 = vunpack.c.l.b16 %v1134
      %v1193 = vunpack.c.h.b16 %v1134
      %v1194 = vunpack.c.l.b16 %v1135
      %v1195 = vunpack.c.h.b16 %v1135
      %v1196 = vpack.c.b16 %v1166, %v1164
      %v1197 = vpack.c.b16 %v1167, %v1165
      %v1198 = vpack.c.b16 %v1170, %v1168
      %v1199 = vpack.c.b16 %v1171, %v1169
      %v1200 = vpack.c.b16 %v1174, %v1172
      %v1201 = vpack.c.b16 %v1175, %v1173
      %v1202 = vpack.c.b16 %v1178, %v1176
      %v1203 = vpack.c.b16 %v1179, %v1177
      %v1204 = vpack.c.b16 %v1182, %v1180
      %v1205 = vpack.c.b16 %v1183, %v1181
      %v1206 = vpack.c.b16 %v1186, %v1184
      %v1207 = vpack.c.b16 %v1187, %v1185
      %v1208 = vpack.c.b16 %v1190, %v1188
      %v1209 = vpack.c.b16 %v1191, %v1189
      %v1210 = vpack.c.b16 %v1194, %v1192
      %v1211 = vpack.c.b16 %v1195, %v1193
      %1228 = vmatprep.subr.bf16.mxu0 %v1197
      %1229 = vmatpush1.bf16.msra.mxu0 %v1196
      %1230 = vmatprep.subr.bf16.mxu0 %v1199
      %1231 = vmatpush1.bf16.msra.mxu0 %v1198
      %1232 = vmatprep.subr.bf16.mxu0 %v1201
      %1233 = vmatpush1.bf16.msra.mxu0 %v1200
      %1234 = vmatprep.subr.bf16.mxu0 %v1203
      %1235 = vmatpush1.bf16.msra.mxu0 %v1202
      %1236 = vmatprep.subr.bf16.mxu0 %v1205
      %1237 = vmatpush1.bf16.msra.mxu0 %v1204
      %1238 = vmatprep.subr.bf16.mxu0 %v1207
      %1239 = vmatpush1.bf16.msra.mxu0 %v1206
      %1240 = vmatprep.subr.bf16.mxu0 %v1209
      %1241 = vmatpush1.bf16.msra.mxu0 %v1208
      %1242 = vmatprep.subr.bf16.mxu0 %v1211
      %1243 = vmatpush1.bf16.msra.mxu0 %v1210
      %1244 = vmatprep.subr.bf16.mxu0 0
      %1245 = vmatpush1.bf16.msra.mxu0 0
      %1246 = vmatprep.subr.bf16.mxu0 0
      %1247 = vmatpush1.bf16.msra.mxu0 0
      %1248 = vmatprep.subr.bf16.mxu0 0
      %1249 = vmatpush1.bf16.msra.mxu0 0
      %1250 = vmatprep.subr.bf16.mxu0 0
      %1251 = vmatpush1.bf16.msra.mxu0 0
      %1252 = vmatprep.subr.bf16.mxu0 0
      %1253 = vmatpush1.bf16.msra.mxu0 0
      %1254 = vmatprep.subr.bf16.mxu0 0
      %1255 = vmatpush1.bf16.msra.mxu0 0
      %1256 = vmatprep.subr.bf16.mxu0 0
      %1257 = vmatpush1.bf16.msra.mxu0 0
      %1258 = vmatprep.subr.bf16.mxu0 0
      %1259 = vmatpush1.bf16.msra.mxu0 0
      %1260 = vmatprep.mubr.bf16.mxu0 0
      %1261 = vmatmul.mubr.bf16.gmra.mrb[0].mxu0 %v1119
      %v1262 = vpop.f32.mrb[0].mxu0
      %v1263 = vadd.f32 %v1141, %v1262
      %v1264 = vpop.f32.mrb[0].mxu0
      %v1265 = vadd.f32 %v1145, %v1264
      %v1266 = vpop.f32.mrb[0].mxu0
      %v1267 = vpop.f32.mrb[0].mxu0
      %1268 = vdwg.mxu0
      %v1269 = vmax.f32 %v1263, 0.0
      %v1270 = vmax.f32 %v1265, 0.0
      %v1271 = vpack.c.bf16 %v1269, %v1269
      %v1272 = vpack.c.bf16 %v1270, %v1270
      %v1273 = vld [vmem:[%s5] sm:$0xf]
      %v1274 = vld [vmem:[%s5 + $0x4] sm:$0xf]
      %v1275 = vld [vmem:[%s5 + $0x8] sm:$0xf]
      %v1276 = vld [vmem:[%s5 + $0xc] sm:$0xf]
      %v1277 = vld [vmem:[%s5 + $0x10] sm:$0xf]
      %v1278 = vld [vmem:[%s5 + $0x14] sm:$0xf]
      %v1279 = vld [vmem:[%s5 + $0x18] sm:$0xf]
      %v1280 = vld [vmem:[%s5 + $0x1c] sm:$0xf]
      %v1281 = vld [vmem:[%s5 + $0x20] sm:$0xf]
      %v1282 = vld [vmem:[%s5 + $0x24] sm:$0xf]
      %v1283 = vld [vmem:[%s5 + $0x28] sm:$0xf]
      %v1284 = vld [vmem:[%s5 + $0x2c] sm:$0xf]
      %v1285 = vld [vmem:[%s5 + $0x30] sm:$0xf]
      %v1286 = vld [vmem:[%s5 + $0x34] sm:$0xf]
      %v1287 = vld [vmem:[%s5 + $0x38] sm:$0xf]
      %v1288 = vld [vmem:[%s5 + $0x3c] sm:$0xf]
      %v1289 = vld [vmem:[%s5 + $0x40] sm:$0xf]
      %v1290 = vld [vmem:[%s5 + $0x44] sm:$0xf]
      %v1291 = vld [vmem:[%s5 + $0x48] sm:$0xf]
      %v1292 = vld [vmem:[%s5 + $0x4c] sm:$0xf]
      %v1293 = vld [vmem:[%s5 + $0x50] sm:$0xf]
      %v1294 = vld [vmem:[%s5 + $0x54] sm:$0xf]
      %v1295 = vld [vmem:[%s5 + $0x58] sm:$0xf]
      %v1296 = vld [vmem:[%s5 + $0x5c] sm:$0xf]
      %v1297 = vld [vmem:[%s5 + $0x60] sm:$0xf]
      %v1298 = vld [vmem:[%s5 + $0x64] sm:$0xf]
      %v1299 = vld [vmem:[%s5 + $0x68] sm:$0xf]
      %v1300 = vld [vmem:[%s5 + $0x6c] sm:$0xf]
      %v1301 = vld [vmem:[%s5 + $0x70] sm:$0xf]
      %v1302 = vld [vmem:[%s5 + $0x74] sm:$0xf]
      %v1303 = vld [vmem:[%s5 + $0x78] sm:$0xf]
      %v1304 = vld [vmem:[%s5 + $0x7c] sm:$0xf]
      %v1305 = vld [vmem:[%s6] sm:$0x1]
      %v1307 = vlaneseq
      %v1308 = vshrl.u32 %v1307, 7
      %v1309 = vsub.s32 0, %v1308
      %v1310 = vrot.slane %v1305, %v1309
      %v1344 = vunpack.c.l.b16 %v1273
      %v1345 = vunpack.c.l.b16 %v1274
      %v1346 = vunpack.c.l.b16 %v1275
      %v1347 = vunpack.c.l.b16 %v1276
      %v1348 = vunpack.c.l.b16 %v1277
      %v1349 = vunpack.c.l.b16 %v1278
      %v1350 = vunpack.c.l.b16 %v1279
      %v1351 = vunpack.c.l.b16 %v1280
      %v1352 = vunpack.c.l.b16 %v1281
      %v1353 = vunpack.c.l.b16 %v1282
      %v1354 = vunpack.c.l.b16 %v1283
      %v1355 = vunpack.c.l.b16 %v1284
      %v1356 = vunpack.c.l.b16 %v1285
      %v1357 = vunpack.c.l.b16 %v1286
      %v1358 = vunpack.c.l.b16 %v1287
      %v1359 = vunpack.c.l.b16 %v1288
      %v1360 = vunpack.c.l.b16 %v1289
      %v1361 = vunpack.c.l.b16 %v1290
      %v1362 = vunpack.c.l.b16 %v1291
      %v1363 = vunpack.c.l.b16 %v1292
      %v1364 = vunpack.c.l.b16 %v1293
      %v1365 = vunpack.c.l.b16 %v1294
      %v1366 = vunpack.c.l.b16 %v1295
      %v1367 = vunpack.c.l.b16 %v1296
      %v1368 = vunpack.c.l.b16 %v1297
      %v1369 = vunpack.c.l.b16 %v1298
      %v1370 = vunpack.c.l.b16 %v1299
      %v1371 = vunpack.c.l.b16 %v1300
      %v1372 = vunpack.c.l.b16 %v1301
      %v1373 = vunpack.c.l.b16 %v1302
      %v1374 = vunpack.c.l.b16 %v1303
      %v1375 = vunpack.c.l.b16 %v1304
      %v1376 = vpack.c.b16 %v1345, %v1344
      %v1377 = vpack.c.b16 %v1347, %v1346
      %v1378 = vpack.c.b16 %v1349, %v1348
      %v1379 = vpack.c.b16 %v1351, %v1350
      %v1380 = vpack.c.b16 %v1353, %v1352
      %v1381 = vpack.c.b16 %v1355, %v1354
      %v1382 = vpack.c.b16 %v1357, %v1356
      %v1383 = vpack.c.b16 %v1359, %v1358
      %v1384 = vpack.c.b16 %v1361, %v1360
      %v1385 = vpack.c.b16 %v1363, %v1362
      %v1386 = vpack.c.b16 %v1365, %v1364
      %v1387 = vpack.c.b16 %v1367, %v1366
      %v1388 = vpack.c.b16 %v1369, %v1368
      %v1389 = vpack.c.b16 %v1371, %v1370
      %v1390 = vpack.c.b16 %v1373, %v1372
      %v1391 = vpack.c.b16 %v1375, %v1374
      %1408 = vmatprep.subr.bf16.mxu0 0
      %1409 = vmatpush1.bf16.msra.mxu0 %v1376
      %1410 = vmatprep.subr.bf16.mxu0 0
      %1411 = vmatpush1.bf16.msra.mxu0 %v1377
      %1412 = vmatprep.subr.bf16.mxu0 0
      %1413 = vmatpush1.bf16.msra.mxu0 %v1378
      %1414 = vmatprep.subr.bf16.mxu0 0
      %1415 = vmatpush1.bf16.msra.mxu0 %v1379
      %1416 = vmatprep.subr.bf16.mxu0 0
      %1417 = vmatpush1.bf16.msra.mxu0 %v1380
      %1418 = vmatprep.subr.bf16.mxu0 0
      %1419 = vmatpush1.bf16.msra.mxu0 %v1381
      %1420 = vmatprep.subr.bf16.mxu0 0
      %1421 = vmatpush1.bf16.msra.mxu0 %v1382
      %1422 = vmatprep.subr.bf16.mxu0 0
      %1423 = vmatpush1.bf16.msra.mxu0 %v1383
      %1424 = vmatprep.subr.bf16.mxu0 0
      %1425 = vmatpush1.bf16.msra.mxu0 %v1384
      %1426 = vmatprep.subr.bf16.mxu0 0
      %1427 = vmatpush1.bf16.msra.mxu0 %v1385
      %1428 = vmatprep.subr.bf16.mxu0 0
      %1429 = vmatpush1.bf16.msra.mxu0 %v1386
      %1430 = vmatprep.subr.bf16.mxu0 0
      %1431 = vmatpush1.bf16.msra.mxu0 %v1387
      %1432 = vmatprep.subr.bf16.mxu0 0
      %1433 = vmatpush1.bf16.msra.mxu0 %v1388
      %1434 = vmatprep.subr.bf16.mxu0 0
      %1435 = vmatpush1.bf16.msra.mxu0 %v1389
      %1436 = vmatprep.subr.bf16.mxu0 0
      %1437 = vmatpush1.bf16.msra.mxu0 %v1390
      %1438 = vmatprep.subr.bf16.mxu0 0
      %1439 = vmatpush1.bf16.msra.mxu0 %v1391
      %1440 = vmatprep.mubr.bf16.mxu0 %v1272
      %1441 = vmatmul.mubr.bf16.gmra.mrb[0].mxu0 %v1271
      %v1442 = vpop.f32.mrb[0].mxu0
      %v1443 = vadd.f32 %v1310, %v1442
      %v1444 = vpop.f32.mrb[0].mxu0
      %v1445 = vpop.f32.mrb[0].mxu0
      %v1446 = vpop.f32.mrb[0].mxu0
      %1447 = vdwg.mxu0
      %1448 = vst [vmem:[%s7] sm:$0xff] %v1443
    $region41: #{_forward.1} parent=1 // pred_fallthru
      _
    // Predicated region
    $region42: #{_forward.1} parent=1 // pred_check
      _
    $region43: #{_forward.1} parent=1 // pred_check_branch
      %1450 = sbr.rel (0) target = $region45
    $region44: #{_forward.1} parent=1 // pred_region
      _
    $region45: #{_forward.1} parent=1 // pred_fallthru
      _
    // Predicated region
    $region46: #{_forward.1} parent=1 // pred_check
      _
    $region47: #{_forward.1} parent=1 // pred_check_branch
      %1452 = sbr.rel (0) target = $region49
    $region48: #{_forward.1} parent=1 // pred_region
      _
    $region49: #{_forward.1} parent=1 // pred_fallthru
      _
    %1453 = vsyncpa [#allocation4], 1

</llo_original>
